<compile_context>
chip_gen: v5e
topology: v5e:2x2
jax: 0.10.0
libtpu: 0.0.40
codegen_flags: <defaults>
</compile_context>

<pallas_src>
import jax
import jax.numpy as jnp
from jax.experimental import pallas as pl
from jax.experimental.pallas import tpu as pltpu


def _round_up(x, m):
    return ((x + m - 1) // m) * m


def _pick_tiles(Np, Dp, vmem_budget=24 * 1024 * 1024):
    """Largest square (tn, tk) that divides Np and fits the VMEM budget.

    Budget counts double-buffered A / h / h0 tiles plus the resident f32
    output tile (which also serves as the accumulator).
    """
    for t in (512, 256, 128):
        if Np % t == 0:
            need = 4 * (2 * t * t            # A tile, double-buffered
                        + 2 * t * Dp         # h tile, double-buffered
                        + 2 * t * Dp         # h0 tile, double-buffered
                        + t * Dp)            # resident output/accumulator
            if need <= vmem_budget:
                return t, t
    return 128, 128


def odefunc_kernel(alpha_ref, a_ref, h_ref, h0_ref, out_ref):
    """Grid: (destination-row tiles : parallel, source-node reduction : arbitrary).

    alpha_ref : (1, 1)    scalar parameter (pre-sigmoid)
    a_ref     : (tn, tk)  weighted adjacency tile  A[dst_tile, src_tile]
    h_ref     : (tk, Dp)  source-node feature rows
    h0_ref    : (tn, Dp)  destination-node feature rows (residual h0)
    out_ref   : (tn, Dp)  f32 output tile; doubles as the k-axis accumulator
    """
    k = pl.program_id(1)

    @pl.when(k == 0)
    def _():
        out_ref[...] = jnp.zeros_like(out_ref)

    # h_new tile accumulation:  out += A_tile @ h_tile   (MXU, f32 accumulate)
    out_ref[...] += jnp.dot(a_ref[...], h_ref[...],
                            preferred_element_type=jnp.float32)

    @pl.when(k == pl.num_programs(1) - 1)
    def _():
        # (1,1) vreg value; sigmoid on the EUP, broadcasts over (tn, Dp).
        sig = jax.nn.sigmoid(alpha_ref[...])
        out_ref[...] = sig * (out_ref[...] - h0_ref[...])


def odefunc_forward(t, x, alpha, src, dst, node_shape, edge_shape):
    """Pallas implementation of ODEFunc.forward.

    x is the flat ODE state: concat([h.flatten(), e.flatten()]).
    Returns concat([sigmoid(alpha) * (Agg(h, e) - h), zeros_like(e)]).
    """
    del t  # unused, same as the PyTorch module
    N, D = node_shape
    E, De = edge_shape
    n_node = N * D

    h = x[:n_node].reshape(N, D).astype(jnp.float32)
    e = x[n_node:].reshape(E, De).astype(jnp.float32)

    # Lane/sublane-friendly padding (lane-dense output, (8,128) rule).
    Np = _round_up(N, 128)
    Dp = _round_up(D, 128)

    h_pad = jnp.zeros((Np, Dp), jnp.float32).at[:N, :D].set(h)

    # Weighted adjacency (wrapper glue, not the hot path): A[dst, src] += e.
    # Valid because De == 1, so the edge scalar broadcasts over the feature
    # dim in u_mul_e; duplicate (dst, src) edges accumulate -> matches sum-agg.
    A = jnp.zeros((Np, Np), jnp.float32).at[dst, src].add(e[:, 0])

    alpha2d = jnp.reshape(alpha, (1, 1)).astype(jnp.float32)

    tn, tk = _pick_tiles(Np, Dp)
    grid = (Np // tn, Np // tk)

    cost = pl.CostEstimate(
        flops=2 * Np * Np * Dp,
        transcendentals=1,
        bytes_accessed=4 * (Np * Np + 3 * Np * Dp),
    )

    h_out = pl.pallas_call(
        odefunc_kernel,
        out_shape=jax.ShapeDtypeStruct((Np, Dp), jnp.float32),
        grid=grid,
        in_specs=[
            pl.BlockSpec((1, 1), lambda i, k: (0, 0)),     # alpha
            pl.BlockSpec((tn, tk), lambda i, k: (i, k)),   # A tile
            pl.BlockSpec((tk, Dp), lambda i, k: (k, 0)),   # h (source rows)
            pl.BlockSpec((tn, Dp), lambda i, k: (i, 0)),   # h0 (dest rows)
        ],
        out_specs=pl.BlockSpec((tn, Dp), lambda i, k: (i, 0)),
        compiler_params=pltpu.CompilerParams(
            dimension_semantics=("parallel", "arbitrary"),
            vmem_limit_bytes=32 * 1024 * 1024,
        ),
        cost_estimate=cost,
    )(alpha2d, A, h_pad, h_pad)

    # x = cat([h.flatten(), zeros_like(e.flatten())])
    h_flat = h_out[:N, :D].reshape(-1)
    return jnp.concatenate([h_flat, jnp.zeros(E * De, dtype=jnp.float32)])


def ref_forward(t, x, alpha, src, dst, node_shape, edge_shape):
    """Pure-JAX reference matching the PyTorch/DGL semantics."""
    del t
    N, D = node_shape
    E, De = edge_shape
    h = x[:N * D].reshape(N, D)
    e = x[N * D:].reshape(E, De)
    m = h[src] * e                                          # u_mul_e
    h_new = jnp.zeros((N, D), jnp.float32).at[dst].add(m)   # sum into dst
    h_out = jax.nn.sigmoid(alpha) * (h_new - h)
    return jnp.concatenate([h_out.reshape(-1), jnp.zeros(E * De, jnp.float32)])


if __name__ == "__main__":
    # Small synthetic graph consistent with the module's forward:
    #   node_shape = (N, D), edge_shape = (E, 1)
    N, D = 8, 32        # 8 nodes, 32-dim node features
    E, De = 16, 1       # 16 directed edges, scalar edge weight each

    key = jax.random.PRNGKey(0)
    k_x, k_e, k_src, k_dst = jax.random.split(key, 4)

    h0 = jax.random.normal(k_x, (N * D,), dtype=jnp.float32)
    e0 = jax.random.normal(k_e, (E * De,), dtype=jnp.float32)
    x = jnp.concatenate([h0, e0])                       # flat ODE state

    src = jax.random.randint(k_src, (E,), 0, N, dtype=jnp.int32)
    dst = jax.random.randint(k_dst, (E,), 0, N, dtype=jnp.int32)

    alpha = jnp.float32(0.0)  # torch.nn.Parameter(torch.tensor(0.0))
    t = jnp.float32(0.0)      # unused, as in the PyTorch module

    out = odefunc_forward(t, x, alpha, src, dst, (N, D), (E, De))
    out = jax.block_until_ready(out)

    ref = ref_forward(t, x, alpha, src, dst, (N, D), (E, De))
    assert out.shape == x.shape
    assert jnp.allclose(out, ref, atol=1e-5, rtol=1e-5), "mismatch vs reference"

    print("KERNEL_OK")
</pallas_src>

<mosaic_0001>
module attributes {stable_mosaic.version = 11 : i64} {
  func.func @odefunc_kernel(%arg0: i32, %arg1: i32, %arg2: memref<1x1xf32, #tpu.memory_space<vmem>>, %arg3: memref<128x128xf32, #tpu.memory_space<vmem>>, %arg4: memref<128x128xf32, #tpu.memory_space<vmem>>, %arg5: memref<128x128xf32, #tpu.memory_space<vmem>>, %arg6: memref<128x128xf32, #tpu.memory_space<vmem>>) attributes {dimension_semantics = [#tpu.dimension_semantics<parallel>, #tpu.dimension_semantics<arbitrary>], iteration_bounds = array<i64: 1, 1>, scalar_prefetch = 0 : i64, scratch_operands = 0 : i64, tpu.core_type = #tpu.core_type<tc>, window_params = [{pipeline_mode = #tpu.pipeline_mode<synchronous>, transform_indices = @transform_0, window_bounds = array<i64: 1, 1>}, {transform_indices = @transform_1, window_bounds = array<i64: 128, 128>}, {transform_indices = @transform_2, window_bounds = array<i64: 128, 128>}, {transform_indices = @transform_3, window_bounds = array<i64: 128, 128>}, {transform_indices = @transform_4, window_bounds = array<i64: 128, 128>}]} {
    %c0_i32 = arith.constant 0 : i32
    %0 = arith.cmpi eq, %arg1, %c0_i32 : i32
    %1 = arith.extui %0 : i1 to i32
    %c0_i32_0 = arith.constant 0 : i32
    %2 = arith.cmpi ne, %1, %c0_i32_0 : i32
    scf.if %2 {
      %cst_10 = arith.constant 0.000000e+00 : f32
      %12 = vector.broadcast %cst_10 : f32 to vector<128x128xf32>
      %c0_11 = arith.constant 0 : index
      %c0_12 = arith.constant 0 : index
      %13 = vector.load %arg6[%c0_11, %c0_12] : memref<128x128xf32, #tpu.memory_space<vmem>>, vector<128x128xf32>
      tpu.vector_store %arg6[%c0_11, %c0_12], %12 {strides = array<i32>} : memref<128x128xf32, #tpu.memory_space<vmem>>, vector<128x128xf32>,
    } else {
    }
    %c0 = arith.constant 0 : index
    %c0_1 = arith.constant 0 : index
    %3 = vector.load %arg6[%c0, %c0_1] : memref<128x128xf32, #tpu.memory_space<vmem>>, vector<128x128xf32>
    %c0_2 = arith.constant 0 : index
    %c0_3 = arith.constant 0 : index
    %4 = vector.load %arg3[%c0_2, %c0_3] : memref<128x128xf32, #tpu.memory_space<vmem>>, vector<128x128xf32>
    %c0_4 = arith.constant 0 : index
    %c0_5 = arith.constant 0 : index
    %5 = vector.load %arg4[%c0_4, %c0_5] : memref<128x128xf32, #tpu.memory_space<vmem>>, vector<128x128xf32>
    %cst = arith.constant dense<0.000000e+00> : vector<128x128xf32>
    %6 = tpu.matmul %4, %5, %cst {dimension_numbers = #tpu.dot_dimension_numbers<[1], [0], [0], [1], [0, 0, 1, 1], [], []>} : vector<128x128xf32>, vector<128x128xf32>, vector<128x128xf32> -> vector<128x128xf32>
    %7 = arith.addf %3, %6 : vector<128x128xf32>
    %c0_6 = arith.constant 0 : index
    %c0_7 = arith.constant 0 : index
    %8 = vector.load %arg6[%c0_6, %c0_7] : memref<128x128xf32, #tpu.memory_space<vmem>>, vector<128x128xf32>
    tpu.vector_store %arg6[%c0_6, %c0_7], %7 {strides = array<i32>} : memref<128x128xf32, #tpu.memory_space<vmem>>, vector<128x128xf32>,
    %c0_i32_8 = arith.constant 0 : i32
    %9 = arith.cmpi eq, %arg1, %c0_i32_8 : i32
    %10 = arith.extui %9 : i1 to i32
    %c0_i32_9 = arith.constant 0 : i32
    %11 = arith.cmpi ne, %10, %c0_i32_9 : i32
    scf.if %11 {
      %c0_10 = arith.constant 0 : index
      %c0_11 = arith.constant 0 : index
      %12 = vector.load %arg2[%c0_10, %c0_11] : memref<1x1xf32, #tpu.memory_space<vmem>>, vector<1x1xf32>
      %13 = arith.negf %12 : vector<1x1xf32>
      %14 = math.exp %13 : vector<1x1xf32>
      %cst_12 = arith.constant 1.000000e+00 : f32
      %15 = vector.broadcast %cst_12 : f32 to vector<1x1xf32>
      %16 = arith.addf %15, %14 : vector<1x1xf32>
      %17 = arith.divf %15, %16 : vector<1x1xf32>
      %c0_13 = arith.constant 0 : index
      %c0_14 = arith.constant 0 : index
      %18 = vector.load %arg6[%c0_13, %c0_14] : memref<128x128xf32, #tpu.memory_space<vmem>>, vector<128x128xf32>
      %c0_15 = arith.constant 0 : index
      %c0_16 = arith.constant 0 : index
      %19 = vector.load %arg5[%c0_15, %c0_16] : memref<128x128xf32, #tpu.memory_space<vmem>>, vector<128x128xf32>
      %20 = arith.subf %18, %19 : vector<128x128xf32>
      %21 = vector.broadcast %17 : vector<1x1xf32> to vector<128x128xf32>
      %22 = arith.mulf %21, %20 : vector<128x128xf32>
      %c0_17 = arith.constant 0 : index
      %c0_18 = arith.constant 0 : index
      %23 = vector.load %arg6[%c0_17, %c0_18] : memref<128x128xf32, #tpu.memory_space<vmem>>, vector<128x128xf32>
      tpu.vector_store %arg6[%c0_17, %c0_18], %22 {strides = array<i32>} : memref<128x128xf32, #tpu.memory_space<vmem>>, vector<128x128xf32>,
    } else {
    }
    return
  }
  func.func @transform_0(%arg0: i32, %arg1: i32) -> (i32, i32) {
    %c0_i32 = arith.constant 0 : i32
    %c0_i32_0 = arith.constant 0 : i32
    %c0_i32_1 = arith.constant 0 : i32
    return %c0_i32, %c0_i32_0 : i32, i32
  }
  func.func @transform_1(%arg0: i32, %arg1: i32) -> (i32, i32) {
    %c0_i32 = arith.constant 0 : i32
    return %arg0, %arg1 : i32, i32
  }
  func.func @transform_2(%arg0: i32, %arg1: i32) -> (i32, i32) {
    %c0_i32 = arith.constant 0 : i32
    %c0_i32_0 = arith.constant 0 : i32
    return %arg1, %c0_i32 : i32, i32
  }
  func.func @transform_3(%arg0: i32, %arg1: i32) -> (i32, i32) {
    %c0_i32 = arith.constant 0 : i32
    %c0_i32_0 = arith.constant 0 : i32
    return %arg0, %c0_i32 : i32, i32
  }
  func.func @transform_4(%arg0: i32, %arg1: i32) -> (i32, i32) {
    %c0_i32 = arith.constant 0 : i32
    %c0_i32_0 = arith.constant 0 : i32
    return %arg0, %c0_i32 : i32, i32
  }
}

</mosaic_0001>

<llo_original>
// kernel: tpu_custom_call.1
$region0: #{tpu_custom_call.1}
  #allocation0 [shape = 'u32[]', space=smem, size = 0x4, offset = 0x4, fixed_abs, tag = 'smem constant byte address 0x4 - core index']
  #allocation1 [shape = 'u32[72,128]{1,0:T(1,128)}', space=vmem, size = 0x9000, scoped, tag = 'internal scratch']
  #allocation2 [shape = 'f32[1,1]{1,0:T(1,128)S(1)}', space=vmem, size = 0x200, scoped, tag = 'scoped memory for tpu_custom_call.1']
  %s0 = inlined_call_operand.<no memory space> [shape: f32[1,1], index: 0, kind: input, shape index: {}]
  %s1 = inlined_call_operand.hbm [shape: f32[128,128], index: 1, kind: input, shape index: {}]
  %s2 = inlined_call_operand.hbm [shape: f32[128,128], index: 2, kind: input, shape index: {}]
  %s3 = inlined_call_operand.hbm [shape: f32[128,128], index: 3, kind: input, shape index: {}]
  %s4 = inlined_call_operand.hbm [shape: f32[128,128], index: 4, kind: output, shape index: {}]
  %s5 = sld [smem:[#allocation0]]
  $region46: #{tpu_custom_call.1} parent=0
    _
  %s7 = ssub.s32 1, %s5
  %s8 = scalar_select 0, %s7, %s5
  %v9 = vstv %s0
  %10 = vst [vmem:[#allocation2] sm:$0x1] %v9
  $region1: #{tpu_custom_call.1} parent=0
    #allocation3 [shape = 'u8[65536]{0}', space=vmem, size = 0x10000, scoped, tag = 'input window, operand 1, single buffered']
    #allocation4 [shape = 's32[1]{0}', space=sflag, size = 0x4, scoped, tag = 'scoped memory for tpu_custom_call.1']
    #allocation5 [shape = 's32[1]{0}', space=sflag, size = 0x4, scoped, tag = 'scoped memory for tpu_custom_call.1']
    #allocation6 [shape = 'u8[65536]{0}', space=vmem, size = 0x10000, scoped, tag = 'input window, operand 2, single buffered']
    #allocation7 [shape = 's32[1]{0}', space=sflag, size = 0x4, scoped, tag = 'scoped memory for tpu_custom_call.1']
    #allocation8 [shape = 'u8[65536]{0}', space=vmem, size = 0x10000, scoped, tag = 'input window, operand 3, single buffered']
    #allocation9 [shape = 'u8[65536]{0}', space=vmem, size = 0x10000, scoped, tag = 'output window, operand 0, single buffered']
    %11 = vsyncpa [#allocation4], 0
    %12 = vsyncpa [#allocation7], 0
    %13 = vsyncpa [#allocation5], 0
    // Predicated region
    $region2: #{tpu_custom_call.1} parent=1 // pred_check
      _
    $region3: #{tpu_custom_call.1} parent=1 // pred_check_branch
      %15 = sbr.rel (0) target = $region5
    $region4: #{tpu_custom_call.1} parent=1 // pred_region
      _
    $region5: #{tpu_custom_call.1} parent=1 // pred_fallthru
      _
    // Predicated region
    $region6: #{tpu_custom_call.1} parent=1 // pred_check
      _
    $region7: #{tpu_custom_call.1} parent=1 // pred_check_branch
      %17 = sbr.rel (0) target = $region9
    $region8: #{tpu_custom_call.1} parent=1 // pred_region
      %19 = vsyncadd [#allocation4], 0
      %s20 = sshll.u32 %s1, 4
      %s21 = int_to_ptr.hbm [resolvable:$true] %s20
      %s22 = sshll.u32 [#allocation3], 4
      %s23 = int_to_ptr.vmem [resolvable:$true] %s22
      %28 = dma.hbm_to_vmem [thread:$0]  %s21, 2048, %s23, [#allocation4], 128, 128, 8
    $region9: #{tpu_custom_call.1} parent=1 // pred_fallthru
      _
    // Predicated region
    $region10: #{tpu_custom_call.1} parent=1 // pred_check
      _
    $region11: #{tpu_custom_call.1} parent=1 // pred_check_branch
      %30 = sbr.rel (0) target = $region13
    $region12: #{tpu_custom_call.1} parent=1 // pred_region
      %32 = vsyncadd [#allocation7], 0
      %s33 = sshll.u32 %s2, 4
      %s34 = int_to_ptr.hbm [resolvable:$true] %s33
      %s35 = sshll.u32 [#allocation6], 4
      %s36 = int_to_ptr.vmem [resolvable:$true] %s35
      %41 = dma.hbm_to_vmem [thread:$0]  %s34, 2048, %s36, [#allocation7], 128, 128, 8
    $region13: #{tpu_custom_call.1} parent=1 // pred_fallthru
      _
    // Predicated region
    $region14: #{tpu_custom_call.1} parent=1 // pred_check
      _
    $region15: #{tpu_custom_call.1} parent=1 // pred_check_branch
      %43 = sbr.rel (0) target = $region17
    $region16: #{tpu_custom_call.1} parent=1 // pred_region
      %45 = vsyncadd [#allocation7], 0
      %s46 = sshll.u32 %s3, 4
      %s47 = int_to_ptr.hbm [resolvable:$true] %s46
      %s48 = sshll.u32 [#allocation8], 4
      %s49 = int_to_ptr.vmem [resolvable:$true] %s48
      %54 = dma.hbm_to_vmem [thread:$0]  %s47, 2048, %s49, [#allocation7], 128, 128, 8
    $region17: #{tpu_custom_call.1} parent=1 // pred_fallthru
      _
    // Predicated region
    $region18: #{tpu_custom_call.1} parent=1 // pred_check
      _
    $region19: #{tpu_custom_call.1} parent=1 // pred_check_branch
      %56 = sbr.rel (0) target = $region21
    $region20: #{tpu_custom_call.1} parent=1 // pred_region
      %58 = dma.done [#allocation4], 2048
    $region21: #{tpu_custom_call.1} parent=1 // pred_fallthru
      _
    // Predicated region
    $region22: #{tpu_custom_call.1} parent=1 // pred_check
      _
    $region23: #{tpu_custom_call.1} parent=1 // pred_check_branch
      %60 = sbr.rel (0) target = $region25
    $region24: #{tpu_custom_call.1} parent=1 // pred_region
      %62 = dma.done [#allocation7], 2048
    $region25: #{tpu_custom_call.1} parent=1 // pred_fallthru
      _
    // Predicated region
    $region26: #{tpu_custom_call.1} parent=1 // pred_check
      _
    $region27: #{tpu_custom_call.1} parent=1 // pred_check_branch
      %64 = sbr.rel (0) target = $region29
    $region28: #{tpu_custom_call.1} parent=1 // pred_region
      %66 = dma.done [#allocation7], 2048
    $region29: #{tpu_custom_call.1} parent=1 // pred_fallthru
      _
    %p67 = scmp.eq.s32.totalorder 0, 0
    // Predicated region
    $region30: #{tpu_custom_call.1} parent=1 // pred_check
      %p68 = pneg %p67
    $region31: #{tpu_custom_call.1} parent=1 // pred_check_branch
      %70 = sbr.rel (%p68) target = $region33
    $region32: #{tpu_custom_call.1} parent=1 // pred_region
      %71 = vst [vmem:[#allocation9] sm:$0xff] 0.0
      %72 = vst [vmem:[#allocation9 + $0x8] sm:$0xff] 0.0
      %73 = vst [vmem:[#allocation9 + $0x10] sm:$0xff] 0.0
      %74 = vst [vmem:[#allocation9 + $0x18] sm:$0xff] 0.0
      %75 = vst [vmem:[#allocation9 + $0x20] sm:$0xff] 0.0
      %76 = vst [vmem:[#allocation9 + $0x28] sm:$0xff] 0.0
      %77 = vst [vmem:[#allocation9 + $0x30] sm:$0xff] 0.0
      %78 = vst [vmem:[#allocation9 + $0x38] sm:$0xff] 0.0
      %79 = vst [vmem:[#allocation9 + $0x40] sm:$0xff] 0.0
      %80 = vst [vmem:[#allocation9 + $0x48] sm:$0xff] 0.0
      %81 = vst [vmem:[#allocation9 + $0x50] sm:$0xff] 0.0
      %82 = vst [vmem:[#allocation9 + $0x58] sm:$0xff] 0.0
      %83 = vst [vmem:[#allocation9 + $0x60] sm:$0xff] 0.0
      %84 = vst [vmem:[#allocation9 + $0x68] sm:$0xff] 0.0
      %85 = vst [vmem:[#allocation9 + $0x70] sm:$0xff] 0.0
      %86 = vst [vmem:[#allocation9 + $0x78] sm:$0xff] 0.0
    $region33: #{tpu_custom_call.1} parent=1 // pred_fallthru
      _
    %v87 = vld [vmem:[#allocation9] sm:$0xff]
    %v88 = vld [vmem:[#allocation9 + $0x8] sm:$0xff]
    %v89 = vld [vmem:[#allocation9 + $0x10] sm:$0xff]
    %v90 = vld [vmem:[#allocation9 + $0x18] sm:$0xff]
    %v91 = vld [vmem:[#allocation9 + $0x20] sm:$0xff]
    %v92 = vld [vmem:[#allocation9 + $0x28] sm:$0xff]
    %v93 = vld [vmem:[#allocation9 + $0x30] sm:$0xff]
    %v94 = vld [vmem:[#allocation9 + $0x38] sm:$0xff]
    %v95 = vld [vmem:[#allocation9 + $0x40] sm:$0xff]
    %v96 = vld [vmem:[#allocation9 + $0x48] sm:$0xff]
    %v97 = vld [vmem:[#allocation9 + $0x50] sm:$0xff]
    %v98 = vld [vmem:[#allocation9 + $0x58] sm:$0xff]
    %v99 = vld [vmem:[#allocation9 + $0x60] sm:$0xff]
    %v100 = vld [vmem:[#allocation9 + $0x68] sm:$0xff]
    %v101 = vld [vmem:[#allocation9 + $0x70] sm:$0xff]
    %v102 = vld [vmem:[#allocation9 + $0x78] sm:$0xff]
    %v103 = vld [vmem:[#allocation3] sm:$0xff]
    %v104 = vld [vmem:[#allocation3 + $0x8] sm:$0xff]
    %v105 = vld [vmem:[#allocation3 + $0x10] sm:$0xff]
    %v106 = vld [vmem:[#allocation3 + $0x18] sm:$0xff]
    %v107 = vld [vmem:[#allocation3 + $0x20] sm:$0xff]
    %v108 = vld [vmem:[#allocation3 + $0x28] sm:$0xff]
    %v109 = vld [vmem:[#allocation3 + $0x30] sm:$0xff]
    %v110 = vld [vmem:[#allocation3 + $0x38] sm:$0xff]
    %v111 = vld [vmem:[#allocation3 + $0x40] sm:$0xff]
    %v112 = vld [vmem:[#allocation3 + $0x48] sm:$0xff]
    %v113 = vld [vmem:[#allocation3 + $0x50] sm:$0xff]
    %v114 = vld [vmem:[#allocation3 + $0x58] sm:$0xff]
    %v115 = vld [vmem:[#allocation3 + $0x60] sm:$0xff]
    %v116 = vld [vmem:[#allocation3 + $0x68] sm:$0xff]
    %v117 = vld [vmem:[#allocation3 + $0x70] sm:$0xff]
    %v118 = vld [vmem:[#allocation3 + $0x78] sm:$0xff]
    %v119 = vld [vmem:[#allocation6] sm:$0xff]
    %v120 = vld [vmem:[#allocation6 + $0x8] sm:$0xff]
    %v121 = vld [vmem:[#allocation6 + $0x10] sm:$0xff]
    %v122 = vld [vmem:[#allocation6 + $0x18] sm:$0xff]
    %v123 = vld [vmem:[#allocation6 + $0x20] sm:$0xff]
    %v124 = vld [vmem:[#allocation6 + $0x28] sm:$0xff]
    %v125 = vld [vmem:[#allocation6 + $0x30] sm:$0xff]
    %v126 = vld [vmem:[#allocation6 + $0x38] sm:$0xff]
    %v127 = vld [vmem:[#allocation6 + $0x40] sm:$0xff]
    %v128 = vld [vmem:[#allocation6 + $0x48] sm:$0xff]
    %v129 = vld [vmem:[#allocation6 + $0x50] sm:$0xff]
    %v130 = vld [vmem:[#allocation6 + $0x58] sm:$0xff]
    %v131 = vld [vmem:[#allocation6 + $0x60] sm:$0xff]
    %v132 = vld [vmem:[#allocation6 + $0x68] sm:$0xff]
    %v133 = vld [vmem:[#allocation6 + $0x70] sm:$0xff]
    %v134 = vld [vmem:[#allocation6 + $0x78] sm:$0xff]
    %135 = vmatpush.msra.mxu0 %v134
    %136 = vmatpush.msra.mxu0 %v133
    %137 = vmatpush.msra.mxu0 %v132
    %138 = vmatpush.msra.mxu0 %v131
    %139 = vmatpush.msra.mxu0 %v130
    %140 = vmatpush.msra.mxu0 %v129
    %141 = vmatpush.msra.mxu0 %v128
    %142 = vmatpush.msra.mxu0 %v127
    %143 = vmatpush.msra.mxu0 %v126
    %144 = vmatpush.msra.mxu0 %v125
    %145 = vmatpush.msra.mxu0 %v124
    %146 = vmatpush.msra.mxu0 %v123
    %147 = vmatpush.msra.mxu0 %v122
    %148 = vmatpush.msra.mxu0 %v121
    %149 = vmatpush.msra.mxu0 %v120
    %150 = vmatpush.msra.mxu0 %v119
    %151 = vmatmul.f32.gmra.mxu0 %v103
    %v152 = vpop.f32.mrf.mxu0
    %v153 = vadd.f32 0.0, %v152
    %154 = vmatmul.f32.gmra.mxu0 %v104
    %v155 = vpop.f32.mrf.mxu0
    %v156 = vadd.f32 0.0, %v155
    %157 = vmatmul.f32.gmra.mxu0 %v105
    %v158 = vpop.f32.mrf.mxu0
    %v159 = vadd.f32 0.0, %v158
    %160 = vmatmul.f32.gmra.mxu0 %v106
    %v161 = vpop.f32.mrf.mxu0
    %v162 = vadd.f32 0.0, %v161
    %163 = vmatmul.f32.gmra.mxu0 %v107
    %v164 = vpop.f32.mrf.mxu0
    %v165 = vadd.f32 0.0, %v164
    %166 = vmatmul.f32.gmra.mxu0 %v108
    %v167 = vpop.f32.mrf.mxu0
    %v168 = vadd.f32 0.0, %v167
    %169 = vmatmul.f32.gmra.mxu0 %v109
    %v170 = vpop.f32.mrf.mxu0
    %v171 = vadd.f32 0.0, %v170
    %172 = vmatmul.f32.gmra.mxu0 %v110
    %v173 = vpop.f32.mrf.mxu0
    %v174 = vadd.f32 0.0, %v173
    %175 = vmatmul.f32.gmra.mxu0 %v111
    %v176 = vpop.f32.mrf.mxu0
    %v177 = vadd.f32 0.0, %v176
    %178 = vmatmul.f32.gmra.mxu0 %v112
    %v179 = vpop.f32.mrf.mxu0
    %v180 = vadd.f32 0.0, %v179
    %181 = vmatmul.f32.gmra.mxu0 %v113
    %v182 = vpop.f32.mrf.mxu0
    %v183 = vadd.f32 0.0, %v182
    %184 = vmatmul.f32.gmra.mxu0 %v114
    %v185 = vpop.f32.mrf.mxu0
    %v186 = vadd.f32 0.0, %v185
    %187 = vmatmul.f32.gmra.mxu0 %v115
    %v188 = vpop.f32.mrf.mxu0
    %v189 = vadd.f32 0.0, %v188
    %190 = vmatmul.f32.gmra.mxu0 %v116
    %v191 = vpop.f32.mrf.mxu0
    %v192 = vadd.f32 0.0, %v191
    %193 = vmatmul.f32.gmra.mxu0 %v117
    %v194 = vpop.f32.mrf.mxu0
    %v195 = vadd.f32 0.0, %v194
    %196 = vmatmul.f32.gmra.mxu0 %v118
    %v197 = vpop.f32.mrf.mxu0
    %v198 = vadd.f32 0.0, %v197
    %199 = vdwg.mxu0
    %v200 = vadd.f32 %v87, %v153
    %v201 = vadd.f32 %v88, %v156
    %v202 = vadd.f32 %v89, %v159
    %v203 = vadd.f32 %v90, %v162
    %v204 = vadd.f32 %v91, %v165
    %v205 = vadd.f32 %v92, %v168
    %v206 = vadd.f32 %v93, %v171
    %v207 = vadd.f32 %v94, %v174
    %v208 = vadd.f32 %v95, %v177
    %v209 = vadd.f32 %v96, %v180
    %v210 = vadd.f32 %v97, %v183
    %v211 = vadd.f32 %v98, %v186
    %v212 = vadd.f32 %v99, %v189
    %v213 = vadd.f32 %v100, %v192
    %v214 = vadd.f32 %v101, %v195
    %v215 = vadd.f32 %v102, %v198
    %216 = vst [vmem:[#allocation9] sm:$0xff] %v200
    %217 = vst [vmem:[#allocation9 + $0x8] sm:$0xff] %v201
    %218 = vst [vmem:[#allocation9 + $0x10] sm:$0xff] %v202
    %219 = vst [vmem:[#allocation9 + $0x18] sm:$0xff] %v203
    %220 = vst [vmem:[#allocation9 + $0x20] sm:$0xff] %v204
    %221 = vst [vmem:[#allocation9 + $0x28] sm:$0xff] %v205
    %222 = vst [vmem:[#allocation9 + $0x30] sm:$0xff] %v206
    %223 = vst [vmem:[#allocation9 + $0x38] sm:$0xff] %v207
    %224 = vst [vmem:[#allocation9 + $0x40] sm:$0xff] %v208
    %225 = vst [vmem:[#allocation9 + $0x48] sm:$0xff] %v209
    %226 = vst [vmem:[#allocation9 + $0x50] sm:$0xff] %v210
    %227 = vst [vmem:[#allocation9 + $0x58] sm:$0xff] %v211
    %228 = vst [vmem:[#allocation9 + $0x60] sm:$0xff] %v212
    %229 = vst [vmem:[#allocation9 + $0x68] sm:$0xff] %v213
    %230 = vst [vmem:[#allocation9 + $0x70] sm:$0xff] %v214
    %231 = vst [vmem:[#allocation9 + $0x78] sm:$0xff] %v215
    // Predicated region
    $region34: #{tpu_custom_call.1} parent=1 // pred_check
      %p232 = pneg %p67
    $region35: #{tpu_custom_call.1} parent=1 // pred_check_branch
      %234 = sbr.rel (%p232) target = $region37
    $region36: #{tpu_custom_call.1} parent=1 // pred_region
      %v235 = vld [vmem:[#allocation2] sm:$0x1]
      %v236 = vxor.u32 %v235, 2147483648
      %v237 = vmul.f32 %v236, 1.442695
      %v238 = vpow.pop %v237
      %v239 = vadd.f32 %v238, 1.0
      %v240 = vrcp.pop %v239
      %v241 = vmul.f32 %v239, %v240
      %v242 = vsub.f32 1.0, %v241
      %v243 = vmul.f32 %v240, %v242
      %v244 = vadd.f32 %v240, %v243
      %vm245 = vweird.f32 %v239
      %vm246 = vweird.f32 %v240
      %vm247 = vmor %vm245, %vm246
      %v248 = vsel %vm247, %v240, %v244
      %v249 = vand.u32 2147483647, %v239
      %vm250 = vcmp.eq.f32.partialorder %v249, 8.507059e+37
      %v251 = vand.u32 %v239, 2147483648
      %v252 = vor.u32 1.1754944e-38, %v251
      %v253 = vsel %vm250, %v252, %v248
      %v254 = vmul.f32 1.0, %v253
      %v255 = vld [vmem:[#allocation9] sm:$0xff]
      %v256 = vld [vmem:[#allocation9 + $0x8] sm:$0xff]
      %v257 = vld [vmem:[#allocation9 + $0x10] sm:$0xff]
      %v258 = vld [vmem:[#allocation9 + $0x18] sm:$0xff]
      %v259 = vld [vmem:[#allocation9 + $0x20] sm:$0xff]
      %v260 = vld [vmem:[#allocation9 + $0x28] sm:$0xff]
      %v261 = vld [vmem:[#allocation9 + $0x30] sm:$0xff]
      %v262 = vld [vmem:[#allocation9 + $0x38] sm:$0xff]
      %v263 = vld [vmem:[#allocation9 + $0x40] sm:$0xff]
      %v264 = vld [vmem:[#allocation9 + $0x48] sm:$0xff]
      %v265 = vld [vmem:[#allocation9 + $0x50] sm:$0xff]
      %v266 = vld [vmem:[#allocation9 + $0x58] sm:$0xff]
      %v267 = vld [vmem:[#allocation9 + $0x60] sm:$0xff]
      %v268 = vld [vmem:[#allocation9 + $0x68] sm:$0xff]
      %v269 = vld [vmem:[#allocation9 + $0x70] sm:$0xff]
      %v270 = vld [vmem:[#allocation9 + $0x78] sm:$0xff]
      %v271 = vld [vmem:[#allocation8] sm:$0xff]
      %v272 = vld [vmem:[#allocation8 + $0x8] sm:$0xff]
      %v273 = vld [vmem:[#allocation8 + $0x10] sm:$0xff]
      %v274 = vld [vmem:[#allocation8 + $0x18] sm:$0xff]
      %v275 = vld [vmem:[#allocation8 + $0x20] sm:$0xff]
      %v276 = vld [vmem:[#allocation8 + $0x28] sm:$0xff]
      %v277 = vld [vmem:[#allocation8 + $0x30] sm:$0xff]
      %v278 = vld [vmem:[#allocation8 + $0x38] sm:$0xff]
      %v279 = vld [vmem:[#allocation8 + $0x40] sm:$0xff]
      %v280 = vld [vmem:[#allocation8 + $0x48] sm:$0xff]
      %v281 = vld [vmem:[#allocation8 + $0x50] sm:$0xff]
      %v282 = vld [vmem:[#allocation8 + $0x58] sm:$0xff]
      %v283 = vld [vmem:[#allocation8 + $0x60] sm:$0xff]
      %v284 = vld [vmem:[#allocation8 + $0x68] sm:$0xff]
      %v285 = vld [vmem:[#allocation8 + $0x70] sm:$0xff]
      %v286 = vld [vmem:[#allocation8 + $0x78] sm:$0xff]
      %v287 = vsub.f32 %v255, %v271
      %v288 = vsub.f32 %v256, %v272
      %v289 = vsub.f32 %v257, %v273
      %v290 = vsub.f32 %v258, %v274
      %v291 = vsub.f32 %v259, %v275
      %v292 = vsub.f32 %v260, %v276
      %v293 = vsub.f32 %v261, %v277
      %v294 = vsub.f32 %v262, %v278
      %v295 = vsub.f32 %v263, %v279
      %v296 = vsub.f32 %v264, %v280
      %v297 = vsub.f32 %v265, %v281
      %v298 = vsub.f32 %v266, %v282
      %v299 = vsub.f32 %v267, %v283
      %v300 = vsub.f32 %v268, %v284
      %v301 = vsub.f32 %v269, %v285
      %v302 = vsub.f32 %v270, %v286
      %v304 = vperm.slane %v254, 0
      %305 = vset.pattern.permute.xlu0 0
      %306 = vperm.xlu0 %305, %v304
      %v307 = vpop.permute.xlu0 %306
      %v309 = vmul.f32 %v307, %v287
      %v310 = vmul.f32 %v307, %v288
      %v311 = vmul.f32 %v307, %v289
      %v312 = vmul.f32 %v307, %v290
      %v313 = vmul.f32 %v307, %v291
      %v314 = vmul.f32 %v307, %v292
      %v315 = vmul.f32 %v307, %v293
      %v316 = vmul.f32 %v307, %v294
      %v317 = vmul.f32 %v307, %v295
      %v318 = vmul.f32 %v307, %v296
      %v319 = vmul.f32 %v307, %v297
      %v320 = vmul.f32 %v307, %v298
      %v321 = vmul.f32 %v307, %v299
      %v322 = vmul.f32 %v307, %v300
      %v323 = vmul.f32 %v307, %v301
      %v324 = vmul.f32 %v307, %v302
      %325 = vst [vmem:[#allocation9] sm:$0xff] %v309
      %326 = vst [vmem:[#allocation9 + $0x8] sm:$0xff] %v310
      %327 = vst [vmem:[#allocation9 + $0x10] sm:$0xff] %v311
      %328 = vst [vmem:[#allocation9 + $0x18] sm:$0xff] %v312
      %329 = vst [vmem:[#allocation9 + $0x20] sm:$0xff] %v313
      %330 = vst [vmem:[#allocation9 + $0x28] sm:$0xff] %v314
      %331 = vst [vmem:[#allocation9 + $0x30] sm:$0xff] %v315
      %332 = vst [vmem:[#allocation9 + $0x38] sm:$0xff] %v316
      %333 = vst [vmem:[#allocation9 + $0x40] sm:$0xff] %v317
      %334 = vst [vmem:[#allocation9 + $0x48] sm:$0xff] %v318
      %335 = vst [vmem:[#allocation9 + $0x50] sm:$0xff] %v319
      %336 = vst [vmem:[#allocation9 + $0x58] sm:$0xff] %v320
      %337 = vst [vmem:[#allocation9 + $0x60] sm:$0xff] %v321
      %338 = vst [vmem:[#allocation9 + $0x68] sm:$0xff] %v322
      %339 = vst [vmem:[#allocation9 + $0x70] sm:$0xff] %v323
      %340 = vst [vmem:[#allocation9 + $0x78] sm:$0xff] %v324
    $region37: #{tpu_custom_call.1} parent=1 // pred_fallthru
      _
    // Predicated region
    $region38: #{tpu_custom_call.1} parent=1 // pred_check
      _
    $region39: #{tpu_custom_call.1} parent=1 // pred_check_branch
      %342 = sbr.rel (0) target = $region41
    $region40: #{tpu_custom_call.1} parent=1 // pred_region
      %344 = vsyncadd [#allocation5], 0
      %s345 = sshll.u32 [#allocation9], 4
      %s346 = int_to_ptr.vmem [resolvable:$true] %s345
      %s347 = sshll.u32 %s4, 4
      %s348 = int_to_ptr.hbm [resolvable:$true] %s347
      %353 = dma.vmem_to_hbm [thread:$0]  %s346, 2048, %s348, [#allocation5], 128, 128, 8
    $region41: #{tpu_custom_call.1} parent=1 // pred_fallthru
      _
    // Predicated region
    $region42: #{tpu_custom_call.1} parent=1 // pred_check
      _
    $region43: #{tpu_custom_call.1} parent=1 // pred_check_branch
      %355 = sbr.rel (0) target = $region45
    $region44: #{tpu_custom_call.1} parent=1 // pred_region
      %357 = dma.done [#allocation5], 2048
    $region45: #{tpu_custom_call.1} parent=1 // pred_fallthru
      _
    %358 = vsyncpa [#allocation4], 1
    %359 = vsyncpa [#allocation7], 1
    %360 = vsyncpa [#allocation5], 1

</llo_original>
